<compile_context>
chip_gen: v6e
topology: v6e:2x2x1
jax: 0.10.0
libtpu: 0.0.40
codegen_flags: <defaults>
</compile_context>

<pallas_src>
import functools

import jax
import jax.numpy as jnp
from jax.experimental import pallas as pl
from jax.experimental.pallas import tpu as pltpu


def _round_up(n, m):
    return (n + m - 1) // m * m


# ---------------------------------------------------------------------------
# Kernel
# ---------------------------------------------------------------------------
def _fused_block_kernel(x_ref, w_in_ref, b_in_ref, w2_ref, b2_ref, o_ref):
    """o = relu( relu(x@W1 + b1) @ W2 + b2 + shortcut(x) ).

    All weights are in (K, N) layout (pre-transposed at prep time) so both
    matmuls are MXU-native jnp.dot contractions.  w_in_ref holds either W1
    (identity shortcut) or [W1 | Ws] stacked along N (projection shortcut).
    """
    out_f_p = o_ref.shape[-1]                       # padded out_features
    has_proj = w_in_ref.shape[1] == 2 * out_f_p     # static at trace time

    xc = x_ref[...].astype(w_in_ref.dtype)          # MXU input dtype

    # One MXU pass computes fc1 (and the shortcut projection, if present).
    z = jnp.dot(xc, w_in_ref[...],
                preferred_element_type=jnp.float32) + b_in_ref[...]

    h = jnp.maximum(z[:, :out_f_p], 0.0)            # relu(fc1), f32

    out = jnp.dot(h.astype(w2_ref.dtype), w2_ref[...],
                  preferred_element_type=jnp.float32) + b2_ref[...]

    if has_proj:
        sc = z[:, out_f_p:]                         # projection shortcut
    else:
        sc = x_ref[...].astype(jnp.float32)         # identity shortcut
    o_ref[...] = jnp.maximum(out + sc, 0.0).astype(o_ref.dtype)


# ---------------------------------------------------------------------------
# One-time parameter preparation (done OUTSIDE the hot path)
# ---------------------------------------------------------------------------
def prepare_params(params, compute_dtype=jnp.bfloat16):
    """Transpose to (K, N), pad N to a multiple of 128, stack W1/Ws along N,
    cast to the MXU dtype.  Zero padding is exact (padded units produce 0)."""
    out_f, in_f = params["w1"].shape
    has_proj = "ws" in params
    if not has_proj and in_f != out_f:
        raise ValueError(
            "identity shortcut requires in_features == out_features; "
            "provide 'ws'/'bs' for a projection shortcut")
    out_f_p = _round_up(out_f, 128)

    def pad_to(a, shape):
        return jnp.pad(a, [(0, s - d) for d, s in zip(a.shape, shape)])

    if has_proj:
        # Stack fc1 and shortcut weights along N: x hits the MXU once.
        w_in = jnp.concatenate(
            [pad_to(params["w1"].T, (in_f, out_f_p)),
             pad_to(params["ws"].T, (in_f, out_f_p))], axis=1)   # (in_f, 2*out_f_p)
        b_in = jnp.concatenate(
            [pad_to(params["b1"], (out_f_p,)),
             pad_to(params["bs"], (out_f_p,))]).reshape(1, 2 * out_f_p)
    else:
        # Identity shortcut: pad both dims so x (padded to out_f_p features)
        # feeds the matmul and the residual add directly.
        w_in = pad_to(params["w1"].T, (out_f_p, out_f_p))        # (out_f_p, out_f_p)
        b_in = pad_to(params["b1"], (out_f_p,)).reshape(1, out_f_p)

    w2 = pad_to(params["w2"].T, (out_f_p, out_f_p))              # (K, N) = (out_f_p, out_f_p)
    b2 = pad_to(params["b2"], (out_f_p,)).reshape(1, out_f_p)

    return {
        "w_in": w_in.astype(compute_dtype),
        "b_in": b_in.astype(jnp.float32),
        "w2": w2.astype(compute_dtype),
        "b2": b2.astype(jnp.float32),
    }


# ---------------------------------------------------------------------------
# Tiling / VMEM policy
# ---------------------------------------------------------------------------
def _resolve_block_b(B, block_b):
    if block_b is not None:
        block_b = max(1, min(block_b, B))
        if block_b < B and block_b % 8 != 0:
            block_b = _round_up(block_b, 8)
        return block_b
    if B < 16:
        return B                               # single (full-extent) tiny block
    if B <= 512:
        return _round_up((B + 1) // 2, 8)      # exactly 2 balanced grid steps (v7x dual-TC)
    return 256                                 # full 256-row MXU tiles on v6e/v7x


@functools.lru_cache(maxsize=None)
def _vmem_limit_bytes():
    """~80% of physical VMEM (headroom for Mosaic scratch); 64 MiB fallback."""
    try:
        cap = getattr(pltpu.get_tpu_info(), "vmem_capacity_bytes", None)
        if cap:
            return int(cap) * 4 // 5
    except Exception:
        pass
    return 64 * 1024 * 1024


# ---------------------------------------------------------------------------
# Wrapper
# ---------------------------------------------------------------------------
@functools.partial(jax.jit, static_argnames=("out_features", "block_b", "lean_io"))
def basic_block2(x, prepared, *, out_features, block_b=None, lean_io=False):
    """x: (B, in_features).  prepared: output of prepare_params()."""
    w_in, b_in = prepared["w_in"], prepared["b_in"]
    w2, b2 = prepared["w2"], prepared["b2"]

    out_f_p = w2.shape[1]
    k = w_in.shape[0]                 # contraction dim the kernel sees

    if lean_io:                       # halve the HBM x / output streams
        x = x.astype(w2.dtype)

    B, in_f = x.shape
    block_b = _resolve_block_b(B, block_b)
    n_blocks = pl.cdiv(B, block_b)
    B_p = n_blocks * block_b

    # Pad rows so the grid tiles B exactly; identity case also pads the
    # feature axis so the residual width matches the lane-dense output.
    pad_rows = B_p - B
    pad_cols = k - in_f
    if pad_rows or pad_cols:
        x = jnp.pad(x, ((0, pad_rows), (0, pad_cols)))

    x_spec = pl.BlockSpec((block_b, k), lambda i: (i, 0))
    o_spec = pl.BlockSpec((block_b, out_f_p), lambda i: (i, 0))
    # Weights/biases: constant block index -> DMA'd once, VMEM-resident.
    w_in_spec = pl.BlockSpec(w_in.shape, lambda i: (0, 0))
    b_in_spec = pl.BlockSpec(b_in.shape, lambda i: (0, 0))
    w2_spec = pl.BlockSpec(w2.shape, lambda i: (0, 0))
    b2_spec = pl.BlockSpec(b2.shape, lambda i: (0, 0))

    out = pl.pallas_call(
        _fused_block_kernel,
        out_shape=jax.ShapeDtypeStruct((B_p, out_f_p), x.dtype),
        grid_spec=pltpu.PrefetchScalarGridSpec(
            num_scalar_prefetch=0,
            grid=(n_blocks,),
            in_specs=[x_spec, w_in_spec, b_in_spec, w2_spec, b2_spec],
            out_specs=o_spec,
        ),
        compiler_params=pltpu.CompilerParams(
            dimension_semantics=("parallel",),
            vmem_limit_bytes=_vmem_limit_bytes(),
        ),
    )(x, w_in, b_in, w2, b2)

    return out[:B, :out_features]


# ---------------------------------------------------------------------------
# Init + reference (PyTorch-equivalent) for the self-test
# ---------------------------------------------------------------------------
def init_params(key, in_features, out_features):
    """nn.Linear-shaped params: W is (out, in), b is (out,)."""
    ks = jax.random.split(key, 6)
    bound1 = 1.0 / jnp.sqrt(in_features)
    bound2 = 1.0 / jnp.sqrt(out_features)
    params = {
        "w1": jax.random.uniform(ks[0], (out_features, in_features),
                                 jnp.float32, -bound1, bound1),
        "b1": jax.random.uniform(ks[1], (out_features,),
                                 jnp.float32, -bound1, bound1),
        "w2": jax.random.uniform(ks[2], (out_features, out_features),
                                 jnp.float32, -bound2, bound2),
        "b2": jax.random.uniform(ks[3], (out_features,),
                                 jnp.float32, -bound2, bound2),
    }
    if in_features != out_features:
        params["ws"] = jax.random.uniform(ks[4], (out_features, in_features),
                                          jnp.float32, -bound1, bound1)
        params["bs"] = jax.random.uniform(ks[5], (out_features,),
                                          jnp.float32, -bound1, bound1)
    return params


def _reference(x, params):
    h = jax.nn.relu(x @ params["w1"].T + params["b1"])
    out = h @ params["w2"].T + params["b2"]
    sc = (x @ params["ws"].T + params["bs"]) if "ws" in params else x
    return jax.nn.relu(out + sc)


if __name__ == "__main__":
    key = jax.random.PRNGKey(0)
    k_x, k_p1, k_p2, k_x3, k_x4 = jax.random.split(key, 5)

    # Case 1: projection shortcut (in != out), default bf16 MXU inputs.
    batch, in_features, out_features = 8, 32, 64
    x = jax.random.normal(k_x, (batch, in_features), jnp.float32)
    params = init_params(k_p1, in_features, out_features)
    ref = _reference(x, params)

    prep_bf16 = prepare_params(params)                       # bf16 compute
    y = jax.block_until_ready(basic_block2(x, prep_bf16, out_features=out_features))
    assert y.shape == (batch, out_features)
    assert jnp.allclose(y, ref, atol=5e-2, rtol=5e-2)

    # Same block, f32 compute path — tight numerical check.
    prep_f32 = prepare_params(params, compute_dtype=jnp.float32)
    y32 = jax.block_until_ready(basic_block2(x, prep_f32, out_features=out_features))
    assert jnp.allclose(y32, ref, atol=1e-5, rtol=1e-5)

    # Bandwidth-lean I/O: x and output streamed as bf16.
    y_lean = jax.block_until_ready(
        basic_block2(x, prep_bf16, out_features=out_features, lean_io=True))
    assert y_lean.dtype == jnp.bfloat16
    assert jnp.allclose(y_lean.astype(jnp.float32), ref, atol=1e-1, rtol=1e-1)

    # Case 2: identity shortcut (in == out), f32 compute, tight check.
    x2 = jax.random.normal(k_x3, (batch, out_features), jnp.float32)
    params_id = init_params(k_p2, out_features, out_features)
    prep_id = prepare_params(params_id, compute_dtype=jnp.float32)
    y_id = jax.block_until_ready(basic_block2(x2, prep_id, out_features=out_features))
    ref_id = _reference(x2, params_id)
    assert y_id.shape == (batch, out_features)
    assert jnp.allclose(y_id, ref_id, atol=1e-5, rtol=1e-5)

    # Case 3: ragged batch with an explicit small tile -> multi-step grid + row padding.
    b3 = 40
    x3 = jax.random.normal(k_x4, (b3, in_features), jnp.float32)
    y3 = jax.block_until_ready(
        basic_block2(x3, prep_f32, out_features=out_features, block_b=16))
    ref3 = _reference(x3, params)
    assert y3.shape == (b3, out_features)
    assert jnp.allclose(y3, ref3, atol=1e-5, rtol=1e-5)

    # Case 4: default tiling policy with B >= 16 -> 2 balanced grid steps.
    b4 = 24
    x4 = jax.random.normal(k_x, (b4, in_features), jnp.float32)
    y4 = jax.block_until_ready(basic_block2(x4, prep_f32, out_features=out_features))
    ref4 = _reference(x4, params)
    assert y4.shape == (b4, out_features)
    assert jnp.allclose(y4, ref4, atol=1e-5, rtol=1e-5)

    print("KERNEL_OK")
</pallas_src>

<mosaic_0001>
module attributes {stable_mosaic.version = 11 : i64} {
  func.func @_fused_block_kernel(%arg0: i32, %arg1: memref<8x32xf32, #tpu.memory_space<vmem>>, %arg2: memref<32x256xbf16, #tpu.memory_space<vmem>>, %arg3: memref<1x256xf32, #tpu.memory_space<vmem>>, %arg4: memref<128x128xbf16, #tpu.memory_space<vmem>>, %arg5: memref<1x128xf32, #tpu.memory_space<vmem>>, %arg6: memref<8x128xf32, #tpu.memory_space<vmem>>) attributes {dimension_semantics = [#tpu.dimension_semantics<parallel>], iteration_bounds = array<i64: 1>, scalar_prefetch = 0 : i64, scratch_operands = 0 : i64, tpu.core_type = #tpu.core_type<tc>, window_params = [{transform_indices = @transform_0, window_bounds = array<i64: 8, 32>}, {pipeline_mode = #tpu.pipeline_mode<synchronous>, transform_indices = @transform_1, window_bounds = array<i64: 32, 256>}, {pipeline_mode = #tpu.pipeline_mode<synchronous>, transform_indices = @transform_2, window_bounds = array<i64: 1, 256>}, {pipeline_mode = #tpu.pipeline_mode<synchronous>, transform_indices = @transform_3, window_bounds = array<i64: 128, 128>}, {pipeline_mode = #tpu.pipeline_mode<synchronous>, transform_indices = @transform_4, window_bounds = array<i64: 1, 128>}, {transform_indices = @transform_5, window_bounds = array<i64: 8, 128>}]} {
    %c0 = arith.constant 0 : index
    %c0_0 = arith.constant 0 : index
    %0 = vector.load %arg1[%c0, %c0_0] : memref<8x32xf32, #tpu.memory_space<vmem>>, vector<8x32xf32>
    %1 = arith.truncf %0 : vector<8x32xf32> to vector<8x32xbf16>
    %c0_1 = arith.constant 0 : index
    %c0_2 = arith.constant 0 : index
    %2 = vector.load %arg2[%c0_1, %c0_2] : memref<32x256xbf16, #tpu.memory_space<vmem>>, vector<32x256xbf16>
    %cst = arith.constant dense<0.000000e+00> : vector<8x256xf32>
    %3 = tpu.matmul %1, %2, %cst {dimension_numbers = #tpu.dot_dimension_numbers<[1], [0], [0], [1], [0, 0, 1, 1], [], []>} : vector<8x32xbf16>, vector<32x256xbf16>, vector<8x256xf32> -> vector<8x256xf32>
    %c0_3 = arith.constant 0 : index
    %c0_4 = arith.constant 0 : index
    %4 = vector.load %arg3[%c0_3, %c0_4] : memref<1x256xf32, #tpu.memory_space<vmem>>, vector<1x256xf32>
    %5 = vector.broadcast %4 : vector<1x256xf32> to vector<8x256xf32>
    %6 = arith.addf %3, %5 : vector<8x256xf32>
    %7 = vector.extract_strided_slice %6 {offsets = [0, 0], sizes = [8, 128], strides = [1, 1]} : vector<8x256xf32> to vector<8x128xf32>
    %cst_5 = arith.constant 0.000000e+00 : f32
    %8 = vector.broadcast %cst_5 : f32 to vector<8x128xf32>
    %9 = arith.maximumf %7, %8 : vector<8x128xf32>
    %10 = arith.truncf %9 : vector<8x128xf32> to vector<8x128xbf16>
    %c0_6 = arith.constant 0 : index
    %c0_7 = arith.constant 0 : index
    %11 = vector.load %arg4[%c0_6, %c0_7] : memref<128x128xbf16, #tpu.memory_space<vmem>>, vector<128x128xbf16>
    %cst_8 = arith.constant dense<0.000000e+00> : vector<8x128xf32>
    %12 = tpu.matmul %10, %11, %cst_8 {dimension_numbers = #tpu.dot_dimension_numbers<[1], [0], [0], [1], [0, 0, 1, 1], [], []>} : vector<8x128xbf16>, vector<128x128xbf16>, vector<8x128xf32> -> vector<8x128xf32>
    %c0_9 = arith.constant 0 : index
    %c0_10 = arith.constant 0 : index
    %13 = vector.load %arg5[%c0_9, %c0_10] : memref<1x128xf32, #tpu.memory_space<vmem>>, vector<1x128xf32>
    %14 = vector.broadcast %13 : vector<1x128xf32> to vector<8x128xf32>
    %15 = arith.addf %12, %14 : vector<8x128xf32>
    %16 = vector.extract_strided_slice %6 {offsets = [0, 128], sizes = [8, 128], strides = [1, 1]} : vector<8x256xf32> to vector<8x128xf32>
    %17 = arith.addf %15, %16 : vector<8x128xf32>
    %cst_11 = arith.constant 0.000000e+00 : f32
    %18 = vector.broadcast %cst_11 : f32 to vector<8x128xf32>
    %19 = arith.maximumf %17, %18 : vector<8x128xf32>
    %c0_12 = arith.constant 0 : index
    %c0_13 = arith.constant 0 : index
    %20 = vector.load %arg6[%c0_12, %c0_13] : memref<8x128xf32, #tpu.memory_space<vmem>>, vector<8x128xf32>
    tpu.vector_store %arg6[%c0_12, %c0_13], %19 {strides = array<i32>} : memref<8x128xf32, #tpu.memory_space<vmem>>, vector<8x128xf32>,
    return
  }
  func.func @transform_0(%arg0: i32) -> (i32, i32) {
    %c0_i32 = arith.constant 0 : i32
    %c0_i32_0 = arith.constant 0 : i32
    return %arg0, %c0_i32 : i32, i32
  }
  func.func @transform_1(%arg0: i32) -> (i32, i32) {
    %c0_i32 = arith.constant 0 : i32
    %c0_i32_0 = arith.constant 0 : i32
    %c0_i32_1 = arith.constant 0 : i32
    return %c0_i32, %c0_i32_0 : i32, i32
  }
  func.func @transform_2(%arg0: i32) -> (i32, i32) {
    %c0_i32 = arith.constant 0 : i32
    %c0_i32_0 = arith.constant 0 : i32
    %c0_i32_1 = arith.constant 0 : i32
    return %c0_i32, %c0_i32_0 : i32, i32
  }
  func.func @transform_3(%arg0: i32) -> (i32, i32) {
    %c0_i32 = arith.constant 0 : i32
    %c0_i32_0 = arith.constant 0 : i32
    %c0_i32_1 = arith.constant 0 : i32
    return %c0_i32, %c0_i32_0 : i32, i32
  }
  func.func @transform_4(%arg0: i32) -> (i32, i32) {
    %c0_i32 = arith.constant 0 : i32
    %c0_i32_0 = arith.constant 0 : i32
    %c0_i32_1 = arith.constant 0 : i32
    return %c0_i32, %c0_i32_0 : i32, i32
  }
  func.func @transform_5(%arg0: i32) -> (i32, i32) {
    %c0_i32 = arith.constant 0 : i32
    %c0_i32_0 = arith.constant 0 : i32
    return %arg0, %c0_i32 : i32, i32
  }
}

</mosaic_0001>

<llo_original>
// kernel: basic_block2.1
$region0: #{basic_block2.1}
  #allocation0 [shape = 'u32[]', space=smem, size = 0x4, offset = 0x4, fixed_abs, tag = 'smem constant byte address 0x4 - core index']
  #allocation1 [shape = 'u32[144,128]{1,0:T(1,128)}', space=vmem, size = 0x12000, scoped, tag = 'internal scratch']
  %s0 = inlined_call_operand.hbm [shape: f32[8,32], index: 0, kind: input, shape index: {}]
  %s1 = inlined_call_operand.hbm [shape: bf16[32,256], index: 1, kind: input, shape index: {}]
  %s2 = inlined_call_operand.vmem [shape: f32[1,256], index: 2, kind: input, shape index: {}]
  %s3 = inlined_call_operand.hbm [shape: bf16[128,128], index: 3, kind: input, shape index: {}]
  %s4 = inlined_call_operand.vmem [shape: f32[1,128], index: 4, kind: input, shape index: {}]
  %s5 = inlined_call_operand.hbm [shape: f32[8,128], index: 5, kind: output, shape index: {}]
  %s6 = sld [smem:[#allocation0]]
  $region42: #{basic_block2.1} parent=0
    _
  %s8 = ssub.s32 1, %s6
  %s9 = scalar_select 0, %s8, %s6
  $region1: #{basic_block2.1} parent=0
    #allocation2 [shape = 'u8[4096]{0}', space=vmem, size = 0x1000, scoped, tag = 'input window, operand 0, single buffered']
    #allocation3 [shape = 's32[1]{0}', space=sflag, size = 0x4, scoped, tag = 'scoped memory for basic_block2.1']
    #allocation4 [shape = 's32[1]{0}', space=sflag, size = 0x4, scoped, tag = 'scoped memory for basic_block2.1']
    #allocation5 [shape = 'u8[16384]{0}', space=vmem, size = 0x4000, scoped, tag = 'input window, operand 1, single buffered']
    #allocation6 [shape = 's32[1]{0}', space=sflag, size = 0x4, scoped, tag = 'scoped memory for basic_block2.1']
    #allocation7 [shape = 'u8[32768]{0}', space=vmem, size = 0x8000, scoped, tag = 'input window, operand 3, single buffered']
    #allocation8 [shape = 'u8[4096]{0}', space=vmem, size = 0x1000, scoped, tag = 'output window, operand 0, single buffered']
    %10 = vsyncpa [#allocation3], 0
    %11 = vsyncpa [#allocation6], 0
    %12 = vsyncpa [#allocation4], 0
    // Predicated region
    $region2: #{basic_block2.1} parent=1 // pred_check
      _
    $region3: #{basic_block2.1} parent=1 // pred_check_branch
      %14 = sbr.rel (0) target = $region5
    $region4: #{basic_block2.1} parent=1 // pred_region
      %s16 = ssub.s32 128, 128
      %17 = vsyncadd [#allocation3], %s16
      %s19 = sshll.u32 [#allocation2], 4
      %s20 = int_to_ptr.vmem [resolvable:$true] %s19
      %22 = dma.hbm_to_vmem [thread:$0]  %s0, 128, %s20, [#allocation3]
    $region5: #{basic_block2.1} parent=1 // pred_fallthru
      _
    // Predicated region
    $region6: #{basic_block2.1} parent=1 // pred_check
      _
    $region7: #{basic_block2.1} parent=1 // pred_check_branch
      %24 = sbr.rel (0) target = $region9
    $region8: #{basic_block2.1} parent=1 // pred_region
      %s26 = ssub.s32 512, 512
      %27 = vsyncadd [#allocation6], %s26
      %s28 = sshll.u32 [#allocation5], 4
      %s29 = int_to_ptr.vmem [resolvable:$true] %s28
      %34 = dma.hbm_to_vmem [thread:$0]  %s1, 512, %s29, [#allocation6], 128, 128, 8
    $region9: #{basic_block2.1} parent=1 // pred_fallthru
      _
    // Predicated region
    $region10: #{basic_block2.1} parent=1 // pred_check
      _
    $region11: #{basic_block2.1} parent=1 // pred_check_branch
      %36 = sbr.rel (0) target = $region13
    $region12: #{basic_block2.1} parent=1 // pred_region
      _
    $region13: #{basic_block2.1} parent=1 // pred_fallthru
      _
    // Predicated region
    $region14: #{basic_block2.1} parent=1 // pred_check
      _
    $region15: #{basic_block2.1} parent=1 // pred_check_branch
      %38 = sbr.rel (0) target = $region17
    $region16: #{basic_block2.1} parent=1 // pred_region
      %s40 = ssub.s32 1024, 1024
      %41 = vsyncadd [#allocation6], %s40
      %s42 = sshll.u32 [#allocation7], 4
      %s43 = int_to_ptr.vmem [resolvable:$true] %s42
      %48 = dma.hbm_to_vmem [thread:$0]  %s3, 1024, %s43, [#allocation6], 64, 64, 4
    $region17: #{basic_block2.1} parent=1 // pred_fallthru
      _
    // Predicated region
    $region18: #{basic_block2.1} parent=1 // pred_check
      _
    $region19: #{basic_block2.1} parent=1 // pred_check_branch
      %50 = sbr.rel (0) target = $region21
    $region20: #{basic_block2.1} parent=1 // pred_region
      _
    $region21: #{basic_block2.1} parent=1 // pred_fallthru
      _
    // Predicated region
    $region22: #{basic_block2.1} parent=1 // pred_check
      _
    $region23: #{basic_block2.1} parent=1 // pred_check_branch
      %52 = sbr.rel (0) target = $region25
    $region24: #{basic_block2.1} parent=1 // pred_region
      %53 = dma.done [#allocation3], 128
    $region25: #{basic_block2.1} parent=1 // pred_fallthru
      _
    // Predicated region
    $region26: #{basic_block2.1} parent=1 // pred_check
      _
    $region27: #{basic_block2.1} parent=1 // pred_check_branch
      %55 = sbr.rel (0) target = $region29
    $region28: #{basic_block2.1} parent=1 // pred_region
      %56 = dma.done [#allocation6], 512
    $region29: #{basic_block2.1} parent=1 // pred_fallthru
      _
    // Predicated region
    $region30: #{basic_block2.1} parent=1 // pred_check
      _
    $region31: #{basic_block2.1} parent=1 // pred_check_branch
      %58 = sbr.rel (0) target = $region33
    $region32: #{basic_block2.1} parent=1 // pred_region
      %59 = dma.done [#allocation6], 1024
    $region33: #{basic_block2.1} parent=1 // pred_fallthru
      _
    %v61 = vld [vmem:[#allocation2] sm:$0xff]
    %v62 = vpack.c.bf16 %v61, %v61
    %v63 = vld [vmem:[#allocation5] sm:$0xff]
    %v64 = vld [vmem:[#allocation5 + $0x8] sm:$0xff]
    %v65 = vld [vmem:[#allocation5 + $0x10] sm:$0xff]
    %v66 = vld [vmem:[#allocation5 + $0x18] sm:$0xff]
    %v67 = vld [vmem:[%s2] sm:$0x3]
    %v69 = vlaneseq
    %v70 = vshrl.u32 %v69, 7
    %v71 = vsub.s32 0, %v70
    %v72 = vrot.slane %v67, %v71
    %v73 = vlaneseq
    %v74 = vshrl.u32 %v73, 7
    %v75 = vsub.s32 1, %v74
    %v76 = vrot.slane %v67, %v75
    %v83 = vunpack.c.l.b16 %v63
    %v84 = vunpack.c.h.b16 %v63
    %v85 = vunpack.c.l.b16 %v64
    %v86 = vunpack.c.h.b16 %v64
    %v87 = vunpack.c.l.b16 %v65
    %v88 = vunpack.c.h.b16 %v65
    %v89 = vunpack.c.l.b16 %v66
    %v90 = vunpack.c.h.b16 %v66
    %v91 = vpack.c.b16 %v85, %v83
    %v92 = vpack.c.b16 %v86, %v84
    %v93 = vpack.c.b16 %v89, %v87
    %v94 = vpack.c.b16 %v90, %v88
    %vm99 = vcmask 261120
    %v101 = vsel %vm99, %v62, 0
    %103 = vmatprep.subr.bf16.mxu0 0
    %104 = vmatpush1.bf16.msra.mxu0 0
    %105 = vmatprep.subr.bf16.mxu0 0
    %106 = vmatpush1.bf16.msra.mxu0 0
    %107 = vmatprep.subr.bf16.mxu0 0
    %108 = vmatpush1.bf16.msra.mxu0 0
    %109 = vmatprep.subr.bf16.mxu0 0
    %110 = vmatpush1.bf16.msra.mxu0 0
    %111 = vmatprep.subr.bf16.mxu0 0
    %112 = vmatpush1.bf16.msra.mxu0 0
    %113 = vmatprep.subr.bf16.mxu0 0
    %114 = vmatpush1.bf16.msra.mxu0 0
    %115 = vmatprep.subr.bf16.mxu0 %v94
    %116 = vmatpush1.bf16.msra.mxu0 %v93
    %117 = vmatprep.subr.bf16.mxu0 %v92
    %118 = vmatpush1.bf16.msra.mxu0 %v91
    %119 = vmatprep.subr.bf16.mxu0 0
    %120 = vmatpush2.bf16.msra.mxu0 0
    %121 = vmatprep.subr.bf16.mxu0 0
    %122 = vmatpush2.bf16.msra.mxu0 0
    %123 = vmatprep.subr.bf16.mxu0 0
    %124 = vmatpush2.bf16.msra.mxu0 0
    %125 = vmatprep.subr.bf16.mxu0 0
    %126 = vmatpush2.bf16.msra.mxu0 0
    %127 = vmatprep.subr.bf16.mxu0 0
    %128 = vmatpush2.bf16.msra.mxu0 0
    %129 = vmatprep.subr.bf16.mxu0 0
    %130 = vmatpush2.bf16.msra.mxu0 0
    %131 = vmatprep.subr.bf16.mxu0 0
    %132 = vmatpush2.bf16.msra.mxu0 0
    %133 = vmatprep.subr.bf16.mxu0 0
    %134 = vmatpush2.bf16.msra.mxu0 0
    %135 = vmatprep.mubr.bf16.mxu0 0
    %136 = vmatmul.mubr.bf16.gmra.mxu0 %v101
    %v137 = vpop.f32.mrf.mxu0
    %v138 = vadd.f32 %v72, %v137
    %v139 = vpop.f32.mrf.mxu0
    %v140 = vadd.f32 %v76, %v139
    %v141 = vpop.f32.mrf.mxu0
    %v142 = vpop.f32.mrf.mxu0
    %143 = vdwg.mxu0
    %v144 = vmax.f32 %v138, 0.0
    %v145 = vpack.c.bf16 %v144, %v144
    %v146 = vld [vmem:[#allocation7] sm:$0xf]
    %v147 = vld [vmem:[#allocation7 + $0x4] sm:$0xf]
    %v148 = vld [vmem:[#allocation7 + $0x8] sm:$0xf]
    %v149 = vld [vmem:[#allocation7 + $0xc] sm:$0xf]
    %v150 = vld [vmem:[#allocation7 + $0x10] sm:$0xf]
    %v151 = vld [vmem:[#allocation7 + $0x14] sm:$0xf]
    %v152 = vld [vmem:[#allocation7 + $0x18] sm:$0xf]
    %v153 = vld [vmem:[#allocation7 + $0x1c] sm:$0xf]
    %v154 = vld [vmem:[#allocation7 + $0x20] sm:$0xf]
    %v155 = vld [vmem:[#allocation7 + $0x24] sm:$0xf]
    %v156 = vld [vmem:[#allocation7 + $0x28] sm:$0xf]
    %v157 = vld [vmem:[#allocation7 + $0x2c] sm:$0xf]
    %v158 = vld [vmem:[#allocation7 + $0x30] sm:$0xf]
    %v159 = vld [vmem:[#allocation7 + $0x34] sm:$0xf]
    %v160 = vld [vmem:[#allocation7 + $0x38] sm:$0xf]
    %v161 = vld [vmem:[#allocation7 + $0x3c] sm:$0xf]
    %v162 = vld [vmem:[%s4] sm:$0x1]
    %v164 = vlaneseq
    %v165 = vshrl.u32 %v164, 7
    %v166 = vsub.s32 0, %v165
    %v167 = vrot.slane %v162, %v166
    %v185 = vunpack.c.l.b16 %v146
    %v186 = vunpack.c.l.b16 %v147
    %v187 = vunpack.c.l.b16 %v148
    %v188 = vunpack.c.l.b16 %v149
    %v189 = vunpack.c.l.b16 %v150
    %v190 = vunpack.c.l.b16 %v151
    %v191 = vunpack.c.l.b16 %v152
    %v192 = vunpack.c.l.b16 %v153
    %v193 = vunpack.c.l.b16 %v154
    %v194 = vunpack.c.l.b16 %v155
    %v195 = vunpack.c.l.b16 %v156
    %v196 = vunpack.c.l.b16 %v157
    %v197 = vunpack.c.l.b16 %v158
    %v198 = vunpack.c.l.b16 %v159
    %v199 = vunpack.c.l.b16 %v160
    %v200 = vunpack.c.l.b16 %v161
    %v201 = vpack.c.b16 %v186, %v185
    %v202 = vpack.c.b16 %v188, %v187
    %v203 = vpack.c.b16 %v190, %v189
    %v204 = vpack.c.b16 %v192, %v191
    %v205 = vpack.c.b16 %v194, %v193
    %v206 = vpack.c.b16 %v196, %v195
    %v207 = vpack.c.b16 %v198, %v197
    %v208 = vpack.c.b16 %v200, %v199
    %217 = vmatprep.subr.bf16.mxu0 0
    %218 = vmatpush1.bf16.msra.mxu0 %v208
    %219 = vmatprep.subr.bf16.mxu0 0
    %220 = vmatpush1.bf16.msra.mxu0 %v207
    %221 = vmatprep.subr.bf16.mxu0 0
    %222 = vmatpush1.bf16.msra.mxu0 %v206
    %223 = vmatprep.subr.bf16.mxu0 0
    %224 = vmatpush1.bf16.msra.mxu0 %v205
    %225 = vmatprep.subr.bf16.mxu0 0
    %226 = vmatpush1.bf16.msra.mxu0 %v204
    %227 = vmatprep.subr.bf16.mxu0 0
    %228 = vmatpush1.bf16.msra.mxu0 %v203
    %229 = vmatprep.subr.bf16.mxu0 0
    %230 = vmatpush1.bf16.msra.mxu0 %v202
    %231 = vmatprep.subr.bf16.mxu0 0
    %232 = vmatpush1.bf16.msra.mxu0 %v201
    %233 = vmatprep.subr.bf16.mxu0 0
    %234 = vmatpush2.bf16.msra.mxu0 0
    %235 = vmatprep.subr.bf16.mxu0 0
    %236 = vmatpush2.bf16.msra.mxu0 0
    %237 = vmatprep.subr.bf16.mxu0 0
    %238 = vmatpush2.bf16.msra.mxu0 0
    %239 = vmatprep.subr.bf16.mxu0 0
    %240 = vmatpush2.bf16.msra.mxu0 0
    %241 = vmatprep.subr.bf16.mxu0 0
    %242 = vmatpush2.bf16.msra.mxu0 0
    %243 = vmatprep.subr.bf16.mxu0 0
    %244 = vmatpush2.bf16.msra.mxu0 0
    %245 = vmatprep.subr.bf16.mxu0 0
    %246 = vmatpush2.bf16.msra.mxu0 0
    %247 = vmatprep.subr.bf16.mxu0 0
    %248 = vmatpush2.bf16.msra.mxu0 0
    %249 = vmatprep.mubr.bf16.mxu0 0
    %250 = vmatmul.mubr.bf16.gmra.mxu0 %v145
    %v251 = vpop.f32.mrf.mxu0
    %v252 = vadd.f32 %v167, %v251
    %v253 = vpop.f32.mrf.mxu0
    %v254 = vpop.f32.mrf.mxu0
    %v255 = vpop.f32.mrf.mxu0
    %256 = vdwg.mxu0
    %v257 = vadd.f32 %v252, %v140
    %v258 = vmax.f32 %v257, 0.0
    %259 = vst [vmem:[#allocation8] sm:$0xff] %v258
    // Predicated region
    $region34: #{basic_block2.1} parent=1 // pred_check
      _
    $region35: #{basic_block2.1} parent=1 // pred_check_branch
      %261 = sbr.rel (0) target = $region37
    $region36: #{basic_block2.1} parent=1 // pred_region
      %s263 = ssub.s32 128, 128
      %264 = vsyncadd [#allocation4], %s263
      %s266 = sshll.u32 [#allocation8], 4
      %s267 = int_to_ptr.vmem [resolvable:$true] %s266
      %269 = dma.vmem_to_hbm [thread:$0]  %s267, 128, %s5, [#allocation4]
    $region37: #{basic_block2.1} parent=1 // pred_fallthru
      _
    // Predicated region
    $region38: #{basic_block2.1} parent=1 // pred_check
      _
    $region39: #{basic_block2.1} parent=1 // pred_check_branch
      %271 = sbr.rel (0) target = $region41
    $region40: #{basic_block2.1} parent=1 // pred_region
      %272 = dma.done [#allocation4], 128
    $region41: #{basic_block2.1} parent=1 // pred_fallthru
      _
    %273 = vsyncpa [#allocation3], 1
    %274 = vsyncpa [#allocation6], 1
    %275 = vsyncpa [#allocation4], 1

</llo_original>
